<compile_context>
chip_gen: v7x
topology: tpu7x:2x2x1
jax: 0.10.0
libtpu: 0.0.40
codegen_flags: <defaults>
</compile_context>

<pallas_src>
import jax
import jax.numpy as jnp
from jax.experimental import pallas as pl
from jax.experimental.pallas import tpu as pltpu

IN_CHANNELS = 6
BLOCK_CHANNELS = (64, 128, 256, 512)
OUT_CHANNELS = 256
LN_EPS = 1e-5


# ----------------------------------------------------------------------------
# Unsqueeze (the literal spec module): new axis comes from the out BlockSpec.
# ----------------------------------------------------------------------------
def _copy_kernel(x_ref, o_ref):
    o_ref[...] = x_ref[...]


def unsqueeze(x, dim):
    """Pallas equivalent of torch.Tensor.unsqueeze(dim)."""
    nd = x.ndim
    dim = dim if dim >= 0 else dim + nd + 1
    out_shape = x.shape[:dim] + (1,) + x.shape[dim:]
    out_block = x.shape[:dim] + (None,) + x.shape[dim:]   # None => squeezed in kernel
    return pl.pallas_call(
        _copy_kernel,
        out_shape=jax.ShapeDtypeStruct(out_shape, x.dtype),
        grid=(1,),
        in_specs=[pl.BlockSpec(x.shape, lambda i, nd=nd: (0,) * nd)],
        out_specs=pl.BlockSpec(out_block, lambda i, nd=nd: (0,) * (nd + 1)),
    )(x)


# ----------------------------------------------------------------------------
# PointNet encoder (previous kernel, performance-improved)
# ----------------------------------------------------------------------------
def _dot_bf16(h, w_ref, b_ref):
    """MXU matmul: bf16 inputs, f32 accumulation, f32 bias add."""
    return (
        jnp.dot(h.astype(jnp.bfloat16), w_ref[...],
                preferred_element_type=jnp.float32)
        + b_ref[...]
    )


def _layernorm(h, g_ref, b_ref):
    mu = jnp.mean(h, axis=-1, keepdims=True)
    var = jnp.mean((h - mu) ** 2, axis=-1, keepdims=True)
    return (h - mu) * jax.lax.rsqrt(var + LN_EPS) * g_ref[...] + b_ref[...]


def _tree_max_rows_to_8(h):
    """(R, C) -> (8, C) max using only sublane-aligned halves.

    Every step is an elementwise jnp.maximum of two (R/2, C) slabs (pure VPU),
    so no cross-sublane XLU reduction runs in the per-tile hot path.
    """
    r = h.shape[0]
    while r > 8:
        half = r // 2
        h = jnp.maximum(h[:half], h[half:])
        r = half
    return h


def pointnet_kernel(
    x_ref,
    w1, b1, g1, be1,
    w2, b2, g2, be2,
    w3, b3, g3, be3,
    w4, b4,
    wp, bp, gp, bep,
    out_ref,
    acc_ref,
):
    n_tile = pl.program_id(1)

    @pl.when(n_tile == 0)
    def _():
        acc_ref[...] = jnp.full(acc_ref.shape, -jnp.inf, acc_ref.dtype)

    x = x_ref[...]  # (tile_n, 6) bf16 — batch dim squeezed by BlockSpec(None,...)

    h = jnp.maximum(_layernorm(_dot_bf16(x, w1, b1), g1, be1), 0.0)
    h = jnp.maximum(_layernorm(_dot_bf16(h, w2, b2), g2, be2), 0.0)
    h = jnp.maximum(_layernorm(_dot_bf16(h, w3, b3), g3, be3), 0.0)
    h = _dot_bf16(h, w4, b4)  # (tile_n, 512) f32

    # Running per-batch max over points, kept as an (8, 512) partial so the
    # per-tile update is pure VPU elementwise max.
    acc_ref[...] = jnp.maximum(acc_ref[...], _tree_max_rows_to_8(h))

    @pl.when(n_tile == pl.num_programs(1) - 1)
    def _():
        # single 8 -> 1 cross-sublane reduce per batch row (torch.max(x, 1)[0])
        m = jnp.max(acc_ref[...], axis=0, keepdims=True)        # (1, 512) f32
        z = _dot_bf16(m, wp, bp)                                # (1, 256) f32
        out_ref[...] = _layernorm(z, gp, bep)


def _cast_params_for_kernel(params):
    """Weight matrices -> bf16 (MXU path); biases / LN params stay f32."""
    (w1, b1, g1, be1,
     w2, b2, g2, be2,
     w3, b3, g3, be3,
     w4, b4,
     wp, bp, gp, bep) = params
    bf = jnp.bfloat16
    return (w1.astype(bf), b1, g1, be1,
            w2.astype(bf), b2, g2, be2,
            w3.astype(bf), b3, g3, be3,
            w4.astype(bf), b4,
            wp.astype(bf), bp, gp, bep)


def pointnet_encoder(x, params, *, tile_n=256):
    """x: (B, N, 6) float32 -> (B, 256) float32."""
    B, N, C = x.shape
    assert C == IN_CHANNELS
    tile_n = min(tile_n, N)
    n8 = tile_n // 8
    assert tile_n % 8 == 0 and (n8 & (n8 - 1)) == 0, "tile_n must be 8 * 2^k"
    assert N % tile_n == 0

    kparams = _cast_params_for_kernel(params)
    xk = x.astype(jnp.bfloat16)  # halves HBM traffic for the point cloud

    def full_spec(arr):
        return pl.BlockSpec(arr.shape, lambda b, n, nd=arr.ndim: (0,) * nd)

    in_specs = [pl.BlockSpec((None, tile_n, IN_CHANNELS), lambda b, n: (b, n, 0))]
    in_specs += [full_spec(p) for p in kparams]
    out_spec = pl.BlockSpec((1, OUT_CHANNELS), lambda b, n: (b, 0))

    flops = (2 * B * N * (IN_CHANNELS * 64 + 64 * 128 + 128 * 256 + 256 * 512)
             + 2 * B * BLOCK_CHANNELS[-1] * OUT_CHANNELS)
    transcendentals = 3 * B * N + B  # one rsqrt per LayerNorm row
    bytes_accessed = (xk.size * xk.dtype.itemsize
                      + sum(int(p.size) * p.dtype.itemsize for p in kparams)
                      + B * OUT_CHANNELS * 4)

    return pl.pallas_call(
        pointnet_kernel,
        out_shape=jax.ShapeDtypeStruct((B, OUT_CHANNELS), jnp.float32),
        grid_spec=pltpu.PrefetchScalarGridSpec(
            num_scalar_prefetch=0,
            grid=(B, N // tile_n),
            in_specs=in_specs,
            out_specs=out_spec,
            scratch_shapes=[pltpu.VMEM((8, BLOCK_CHANNELS[-1]), jnp.float32)],
        ),
        compiler_params=pltpu.CompilerParams(
            dimension_semantics=("parallel", "arbitrary"),
            vmem_limit_bytes=64 * 1024 * 1024,
        ),
        cost_estimate=pl.CostEstimate(
            flops=int(flops),
            transcendentals=int(transcendentals),
            bytes_accessed=int(bytes_accessed),
        ),
    )(xk, *kparams)


# ----------------------------------------------------------------------------
# Parameters + pure-JAX reference (matching bf16-matmul / f32-accumulate math)
# ----------------------------------------------------------------------------
def init_params(key):
    dims = [IN_CHANNELS] + list(BLOCK_CHANNELS)
    keys = jax.random.split(key, 16)
    params = []
    ki = 0
    for li in range(4):
        fan_in, fan_out = dims[li], dims[li + 1]
        w = jax.random.normal(keys[ki], (fan_in, fan_out), jnp.float32) * (1.0 / jnp.sqrt(fan_in)); ki += 1
        b = jax.random.normal(keys[ki], (1, fan_out), jnp.float32) * 0.01; ki += 1
        params += [w, b]
        if li < 3:
            params += [jnp.ones((1, fan_out), jnp.float32), jnp.zeros((1, fan_out), jnp.float32)]
    wp = jax.random.normal(keys[ki], (BLOCK_CHANNELS[-1], OUT_CHANNELS), jnp.float32) * (1.0 / jnp.sqrt(BLOCK_CHANNELS[-1])); ki += 1
    bp = jax.random.normal(keys[ki], (1, OUT_CHANNELS), jnp.float32) * 0.01; ki += 1
    params += [wp, bp, jnp.ones((1, OUT_CHANNELS), jnp.float32), jnp.zeros((1, OUT_CHANNELS), jnp.float32)]
    return tuple(params)


def _ref_dot(h, w, b):
    return jnp.dot(h.astype(jnp.bfloat16), w.astype(jnp.bfloat16),
                   preferred_element_type=jnp.float32) + b


def reference_forward(x, params):
    (w1, b1, g1, be1,
     w2, b2, g2, be2,
     w3, b3, g3, be3,
     w4, b4,
     wp, bp, gp, bep) = params

    def ln(h, g, b):
        mu = jnp.mean(h, axis=-1, keepdims=True)
        var = jnp.mean((h - mu) ** 2, axis=-1, keepdims=True)
        return (h - mu) * jax.lax.rsqrt(var + LN_EPS) * g + b

    h = jnp.maximum(ln(_ref_dot(x, w1, b1), g1, be1), 0.0)
    h = jnp.maximum(ln(_ref_dot(h, w2, b2), g2, be2), 0.0)
    h = jnp.maximum(ln(_ref_dot(h, w3, b3), g3, be3), 0.0)
    h = _ref_dot(h, w4, b4)
    h = jnp.max(h, axis=1)                    # torch.max(x, 1)[0]
    return ln(_ref_dot(h, wp, bp), gp, bep)


if __name__ == "__main__":
    key = jax.random.PRNGKey(0)
    kx, kp, ku = jax.random.split(key, 3)

    # --- literal spec module: Unsqueeze(dim=1) ---
    u_in = jax.random.normal(ku, (2, 8, 32), jnp.float32)
    u_out = jax.block_until_ready(unsqueeze(u_in, dim=1))
    assert u_out.shape == (2, 1, 8, 32)
    assert jnp.array_equal(u_out, jnp.expand_dims(u_in, 1)), "unsqueeze mismatch"

    # --- PointNet encoder (previous kernel, perf-improved) ---
    B, N = 2, 512
    x = jax.random.normal(kx, (B, N, IN_CHANNELS), jnp.float32)
    params = init_params(kp)

    out = jax.block_until_ready(pointnet_encoder(x, params))   # tile_n defaults to 256
    ref = reference_forward(x, params)
    assert out.shape == (B, OUT_CHANNELS)
    assert jnp.allclose(out, ref, atol=2e-3, rtol=2e-3), "mismatch vs pure-JAX reference"

    print("KERNEL_OK")
</pallas_src>

<mosaic_0001>
module attributes {stable_mosaic.version = 11 : i64} {
  func.func @_copy_kernel(%arg0: i32, %arg1: memref<2x8x32xf32, #tpu.memory_space<vmem>>, %arg2: memref<2x1x8x32xf32, #tpu.memory_space<vmem>>) attributes {dimension_semantics = [#tpu.dimension_semantics<arbitrary>], iteration_bounds = array<i64: 1>, scalar_prefetch = 0 : i64, scratch_operands = 0 : i64, tpu.core_type = #tpu.core_type<tc>, window_params = [{pipeline_mode = #tpu.pipeline_mode<synchronous>, transform_indices = @transform_0, window_bounds = array<i64: 2, 8, 32>}, {pipeline_mode = #tpu.pipeline_mode<synchronous>, transform_indices = @transform_1, window_bounds = array<i64: 2, 1, 8, 32>}]} {
    %c0 = arith.constant 0 : index
    %c0_0 = arith.constant 0 : index
    %c0_1 = arith.constant 0 : index
    %0 = vector.load %arg1[%c0, %c0_0, %c0_1] : memref<2x8x32xf32, #tpu.memory_space<vmem>>, vector<2x8x32xf32>
    %c0_2 = arith.constant 0 : index
    %c0_3 = arith.constant 0 : index
    %c0_4 = arith.constant 0 : index
    %c0_5 = arith.constant 0 : index
    %1 = vector.load %arg2[%c0_2, %c0_3, %c0_4, %c0_5] : memref<2x1x8x32xf32, #tpu.memory_space<vmem>>, vector<2x1x8x32xf32>
    %2 = vector.shape_cast %1 : vector<2x1x8x32xf32> to vector<2x8x32xf32>
    %3 = vector.shape_cast %0 : vector<2x8x32xf32> to vector<2x1x8x32xf32>
    tpu.vector_store %arg2[%c0_2, %c0_3, %c0_4, %c0_5], %3 {strides = array<i32>} : memref<2x1x8x32xf32, #tpu.memory_space<vmem>>, vector<2x1x8x32xf32>,
    return
  }
  func.func @transform_0(%arg0: i32) -> (i32, i32, i32) {
    %c0_i32 = arith.constant 0 : i32
    %c0_i32_0 = arith.constant 0 : i32
    %c0_i32_1 = arith.constant 0 : i32
    %c0_i32_2 = arith.constant 0 : i32
    return %c0_i32, %c0_i32_0, %c0_i32_1 : i32, i32, i32
  }
  func.func @transform_1(%arg0: i32) -> (i32, i32, i32, i32) {
    %c0_i32 = arith.constant 0 : i32
    %c0_i32_0 = arith.constant 0 : i32
    %c0_i32_1 = arith.constant 0 : i32
    %c0_i32_2 = arith.constant 0 : i32
    %c0_i32_3 = arith.constant 0 : i32
    return %c0_i32, %c0_i32_0, %c0_i32_1, %c0_i32_2 : i32, i32, i32, i32
  }
}

</mosaic_0001>

<llo_original>
// kernel: tpu_custom_call.1
$region0: #{tpu_custom_call.1}
  #allocation0 [shape = 'u32[]', space=smem, size = 0x4, offset = 0x4, fixed_abs, tag = 'smem constant byte address 0x4 - core index']
  #allocation1 [shape = 'u32[144,128]{1,0:T(1,128)}', space=vmem, size = 0x12000, scoped, tag = 'internal scratch']
  %s0 = inlined_call_operand.hbm [shape: f32[2,8,32], index: 0, kind: input, shape index: {}]
  %s1 = inlined_call_operand.hbm [shape: f32[2,1,8,32], index: 1, kind: output, shape index: {}]
  %s2 = sld [smem:[#allocation0]]
  $region18: #{tpu_custom_call.1} parent=0
    _
  %s4 = ssub.s32 1, %s2
  %s5 = scalar_select 0, %s4, %s2
  $region1: #{tpu_custom_call.1} parent=0
    #allocation2 [shape = 'u8[8192]{0}', space=vmem, size = 0x2000, scoped, tag = 'input window, operand 0, single buffered']
    #allocation3 [shape = 's32[1]{0}', space=sflag, size = 0x4, scoped, tag = 'scoped memory for tpu_custom_call.1']
    #allocation4 [shape = 's32[1]{0}', space=sflag, size = 0x4, scoped, tag = 'scoped memory for tpu_custom_call.1']
    #allocation5 [shape = 'u8[8192]{0}', space=vmem, size = 0x2000, scoped, tag = 'output window, operand 0, single buffered']
    %6 = vsyncpa [#allocation3], 0
    %7 = vsyncpa [#allocation4], 0
    // Predicated region
    $region2: #{tpu_custom_call.1} parent=1 // pred_check
      _
    $region3: #{tpu_custom_call.1} parent=1 // pred_check_branch
      %9 = sbr.rel (0) target = $region5
    $region4: #{tpu_custom_call.1} parent=1 // pred_region
      %s11 = ssub.s32 256, 256
      %12 = vsyncadd [#allocation3], %s11
      %s13 = sshll.u32 [#allocation2], 4
      %s14 = int_to_ptr.vmem [resolvable:$true] %s13
      %19 = dma.hbm_to_vmem [thread:$0]  %s0, 256, %s14, [#allocation3], 128, 128, 8
    $region5: #{tpu_custom_call.1} parent=1 // pred_fallthru
      _
    // Predicated region
    $region6: #{tpu_custom_call.1} parent=1 // pred_check
      _
    $region7: #{tpu_custom_call.1} parent=1 // pred_check_branch
      %21 = sbr.rel (0) target = $region9
    $region8: #{tpu_custom_call.1} parent=1 // pred_region
      %22 = dma.done [#allocation3], 256
    $region9: #{tpu_custom_call.1} parent=1 // pred_fallthru
      _
    %v23 = vld [vmem:[#allocation2] sm:$0xff]
    %v24 = vld [vmem:[#allocation2 + $0x8] sm:$0xff]
    %vm25 = vcmask 261120
    %26 = vst.msk [vmem:[#allocation5] sm:$0xff] %vm25, %v23
    %27 = vst.msk [vmem:[#allocation5 + $0x8] sm:$0xff] %vm25, %v24
    // Predicated region
    $region10: #{tpu_custom_call.1} parent=1 // pred_check
      _
    $region11: #{tpu_custom_call.1} parent=1 // pred_check_branch
      %29 = sbr.rel (0) target = $region13
    $region12: #{tpu_custom_call.1} parent=1 // pred_region
      %s31 = ssub.s32 256, 256
      %32 = vsyncadd [#allocation4], %s31
      %s33 = sshll.u32 [#allocation5], 4
      %s34 = int_to_ptr.vmem [resolvable:$true] %s33
      %39 = dma.vmem_to_hbm [thread:$0]  %s34, 256, %s1, [#allocation4], 128, 128, 8
    $region13: #{tpu_custom_call.1} parent=1 // pred_fallthru
      _
    // Predicated region
    $region14: #{tpu_custom_call.1} parent=1 // pred_check
      _
    $region15: #{tpu_custom_call.1} parent=1 // pred_check_branch
      %41 = sbr.rel (0) target = $region17
    $region16: #{tpu_custom_call.1} parent=1 // pred_region
      %42 = dma.done [#allocation4], 256
    $region17: #{tpu_custom_call.1} parent=1 // pred_fallthru
      _
    %43 = vsyncpa [#allocation3], 1
    %44 = vsyncpa [#allocation4], 1

</llo_original>
